<compile_context>
chip_gen: v7x
topology: tpu7x:2x2x1
jax: 0.10.0
libtpu: 0.0.40
codegen_flags: <defaults>
</compile_context>

<pallas_src>
import functools
import math

import jax
import jax.numpy as jnp
from jax.experimental import pallas as pl
from jax.experimental.pallas import tpu as pltpu

ALPHA = 0.1
THETA = 0.5
NUM_LAYERS = 20

_VMEM_LIMIT_BYTES = 48 * 1024 * 1024  # fits v7x (64 MiB physical) with headroom


def _round_up(x, m):
    return ((x + m - 1) // m) * m


def _compiler_params():
    return pltpu.CompilerParams(
        dimension_semantics=("parallel",),   # row tiles are independent -> 2 TCs on v7x
        vmem_limit_bytes=_VMEM_LIMIT_BYTES,
    )


def _pick_tile_n(n):
    # Dominant VMEM consumer is the double-buffered bf16 adjacency row tile:
    # 2 buffers * tile_n * n_pad * 2 bytes.  Budget ~8 MiB for it so the kernel
    # (plus the resident [N, D] feature block) comfortably fits v7x's 64 MiB VMEM.
    n8 = _round_up(n, 8)
    t = (8 << 20) // max(2 * n8 * 2, 1)
    t = max(8, min(512, (t // 8) * 8))
    return int(min(t, n8))


# ----------------------------- kernels ---------------------------------------


def linear_relu_kernel(x_ref, w_ref, b_ref, out_ref):
    # out = relu(x @ W + b)   (lins[0]; W passed in bf16, f32 accumulation)
    y = jnp.dot(x_ref[...].astype(jnp.bfloat16), w_ref[...],
                preferred_element_type=jnp.float32) + b_ref[...]
    out_ref[...] = jnp.maximum(y, 0.0)


def gcn2_layer_kernel(adj_ref, x_ref, x0a_ref, wd_ref, out_ref):
    # s   = (1-alpha) * A_hat @ x + alpha * x_0   (adj and x0 pre-scaled outside)
    # out = relu((1-beta)*s + beta*(s @ W)) == relu(s + s @ (beta*(W - I)))
    s = jnp.dot(adj_ref[...], x_ref[...].astype(jnp.bfloat16),
                preferred_element_type=jnp.float32) + x0a_ref[...]
    out = s + jnp.dot(s.astype(jnp.bfloat16), wd_ref[...],
                      preferred_element_type=jnp.float32)
    out_ref[...] = jnp.maximum(out, 0.0)


def linear_logsoftmax_kernel(x_ref, w_ref, b_ref, out_ref):
    # logits = x @ W + b, then row-wise log_softmax.  Padded class columns carry
    # bias -1e30, so exp(.)=0 and the real columns are numerically unchanged.
    logits = jnp.dot(x_ref[...].astype(jnp.bfloat16), w_ref[...],
                     preferred_element_type=jnp.float32) + b_ref[...]
    z = logits - jnp.max(logits, axis=-1, keepdims=True)
    lse = jnp.log(jnp.sum(jnp.exp(z), axis=-1, keepdims=True))
    out_ref[...] = z - lse


# ----------------------------- wrappers ---------------------------------------


def linear_relu(x, w_bf16, b, *, tile_n):
    n_pad, f_in = x.shape
    d = w_bf16.shape[1]
    return pl.pallas_call(
        linear_relu_kernel,
        out_shape=jax.ShapeDtypeStruct((n_pad, d), jnp.float32),
        grid_spec=pltpu.PrefetchScalarGridSpec(
            num_scalar_prefetch=0,
            grid=(n_pad // tile_n,),
            in_specs=[
                pl.BlockSpec((tile_n, f_in), lambda i: (i, 0)),  # node-row tile
                pl.BlockSpec((f_in, d), lambda i: (0, 0)),       # resident weight
                pl.BlockSpec((1, d), lambda i: (0, 0)),          # resident bias
            ],
            out_specs=pl.BlockSpec((tile_n, d), lambda i: (i, 0)),
        ),
        compiler_params=_compiler_params(),
    )(x, w_bf16, b)


def gcn2_layer(adj_eff_bf16, x, x0a, w_delta_bf16, *, tile_n):
    n_pad, d = x.shape
    return pl.pallas_call(
        gcn2_layer_kernel,
        out_shape=jax.ShapeDtypeStruct((n_pad, d), jnp.float32),
        grid_spec=pltpu.PrefetchScalarGridSpec(
            num_scalar_prefetch=0,
            grid=(n_pad // tile_n,),
            in_specs=[
                pl.BlockSpec((tile_n, n_pad), lambda i: (i, 0)),  # dst-row adj tile
                pl.BlockSpec((n_pad, d), lambda i: (0, 0)),       # full current x (resident)
                pl.BlockSpec((tile_n, d), lambda i: (i, 0)),      # alpha * x_0 tile
                pl.BlockSpec((d, d), lambda i: (0, 0)),           # beta*(W - I) (resident)
            ],
            out_specs=pl.BlockSpec((tile_n, d), lambda i: (i, 0)),
        ),
        compiler_params=_compiler_params(),
    )(adj_eff_bf16, x, x0a, w_delta_bf16)


def linear_logsoftmax(x, w_bf16, b, *, tile_n):
    n_pad, d = x.shape
    c_pad = w_bf16.shape[1]
    return pl.pallas_call(
        linear_logsoftmax_kernel,
        out_shape=jax.ShapeDtypeStruct((n_pad, c_pad), jnp.float32),
        grid_spec=pltpu.PrefetchScalarGridSpec(
            num_scalar_prefetch=0,
            grid=(n_pad // tile_n,),
            in_specs=[
                pl.BlockSpec((tile_n, d), lambda i: (i, 0)),
                pl.BlockSpec((d, c_pad), lambda i: (0, 0)),
                pl.BlockSpec((1, c_pad), lambda i: (0, 0)),
            ],
            out_specs=pl.BlockSpec((tile_n, c_pad), lambda i: (i, 0)),
        ),
        compiler_params=_compiler_params(),
    )(x, w_bf16, b)


# ----------------------------- model ------------------------------------------


def gcn_norm_dense(adj01):
    """PyG gcn_norm on a dense 0/1 adjacency: D^{-1/2} (A + I) D^{-1/2}."""
    n = adj01.shape[0]
    a = jnp.maximum(adj01, jnp.eye(n, dtype=adj01.dtype))   # add self-loops
    dinv = jax.lax.rsqrt(jnp.sum(a, axis=1))                # deg >= 1 (self-loop)
    return a * dinv[:, None] * dinv[None, :]


def gcniinet_forward(x, adj_hat, params, *, tile_n=None):
    """GCNIINet forward (eval mode). x: [N, F_in]; adj_hat: [N, N] normalized adj."""
    n, f_in = x.shape
    d = params["w_lin0"].shape[1]
    c = params["w_lin1"].shape[1]

    if tile_n is None:
        tile_n = _pick_tile_n(n)
    assert tile_n % 8 == 0
    n_pad = _round_up(n, tile_n)
    c_pad = _round_up(max(c, 128), 128)

    # Pad the node dimension; padded nodes have all-zero adjacency rows/columns,
    # so they never influence real rows and are sliced off at the end.
    xp = jnp.zeros((n_pad, f_in), jnp.float32).at[:n, :].set(x)
    adjp = jnp.zeros((n_pad, n_pad), jnp.float32).at[:n, :n].set(adj_hat)
    adj_eff = ((1.0 - ALPHA) * adjp).astype(jnp.bfloat16)

    betas = [math.log(THETA / (l + 1) + 1.0) for l in range(NUM_LAYERS)]
    eye = jnp.eye(d, dtype=jnp.float32)
    w_deltas = [
        (betas[l] * (params["w_convs"][l] - eye)).astype(jnp.bfloat16)
        for l in range(NUM_LAYERS)
    ]

    # TODO(synk): args.feature_sparse sigmoid feature-gating path not lowered.
    # F.dropout(training=False) == identity throughout.
    h = linear_relu(xp, params["w_lin0"].astype(jnp.bfloat16), params["b_lin0"],
                    tile_n=tile_n)                 # x = x_0 = relu(lins[0](x))
    x0a = ALPHA * h                                # alpha * x_0, shared by all layers

    for l in range(NUM_LAYERS):
        # TODO(synk): args.adj_sparse learned edge-gating (dynamic edge filtering)
        # path not lowered; dense normalized adjacency (edge_weight=None) is used.
        h = gcn2_layer(adj_eff, h, x0a, w_deltas[l], tile_n=tile_n)

    w1p = (jnp.zeros((d, c_pad), jnp.float32).at[:, :c]
           .set(params["w_lin1"])).astype(jnp.bfloat16)
    b1p = jnp.full((1, c_pad), -1e30, dtype=jnp.float32).at[:, :c].set(params["b_lin1"])
    out = linear_logsoftmax(h, w1p, b1p, tile_n=tile_n)
    return out[:n, :c]


def gcniinet_reference(x, adj_hat, params):
    """Pure-JAX reference of the same module math, mirroring the kernel's
    bf16-operand / f32-accumulate matmul dtypes."""
    def mm(a, b):
        return jnp.dot(a.astype(jnp.bfloat16), b.astype(jnp.bfloat16),
                       preferred_element_type=jnp.float32)

    d = params["w_lin0"].shape[1]
    betas = [math.log(THETA / (l + 1) + 1.0) for l in range(NUM_LAYERS)]
    eye = jnp.eye(d, dtype=jnp.float32)

    h = jnp.maximum(mm(x, params["w_lin0"]) + params["b_lin0"], 0.0)
    x0a = ALPHA * h
    adj_eff = ((1.0 - ALPHA) * adj_hat).astype(jnp.bfloat16)
    for l in range(NUM_LAYERS):
        wd = (betas[l] * (params["w_convs"][l] - eye)).astype(jnp.bfloat16)
        s = mm(adj_eff, h) + x0a
        h = jnp.maximum(s + mm(s, wd), 0.0)
    logits = mm(h, params["w_lin1"]) + params["b_lin1"]
    return jax.nn.log_softmax(logits, axis=-1)


if __name__ == "__main__":
    N, F_IN, D, C, E = 48, 16, 64, 4, 160     # nodes, in-features, args.dim, classes, edges
    TILE_N = 16                               # 3 row tiles; real graphs: _pick_tile_n default

    key = jax.random.PRNGKey(0)
    ks = jax.random.split(key, 6)

    x = jax.random.normal(ks[0], (N, F_IN), dtype=jnp.float32)
    src = jax.random.randint(ks[1], (E,), 0, N)
    dst = jax.random.randint(ks[2], (E,), 0, N)
    adj01 = jnp.zeros((N, N), jnp.float32).at[dst, src].set(1.0)
    adj01 = jnp.maximum(adj01, adj01.T)       # undirected graph
    adj_hat = gcn_norm_dense(adj01)           # D^-1/2 (A + I) D^-1/2

    params = {
        "w_lin0": 0.2 * jax.random.normal(ks[3], (F_IN, D), dtype=jnp.float32),
        "b_lin0": jnp.zeros((1, D), dtype=jnp.float32),
        "w_convs": 0.05 * jax.random.normal(ks[4], (NUM_LAYERS, D, D), dtype=jnp.float32),
        "w_lin1": 0.2 * jax.random.normal(ks[5], (D, C), dtype=jnp.float32),
        "b_lin1": jnp.zeros((1, C), dtype=jnp.float32),
    }

    fwd = jax.jit(gcniinet_forward, static_argnames=("tile_n",))
    out = jax.block_until_ready(fwd(x, adj_hat, params, tile_n=TILE_N))

    ref = jax.block_until_ready(jax.jit(gcniinet_reference)(x, adj_hat, params))

    assert out.shape == (N, C)
    # log_softmax rows must exponentiate-sum to 1.
    assert jnp.allclose(jnp.sum(jnp.exp(out), axis=-1), 1.0, atol=1e-4)
    # Match the dtype-mirrored pure-JAX reference.
    assert jnp.allclose(out, ref, atol=2e-3, rtol=0.0), float(jnp.max(jnp.abs(out - ref)))
    print("KERNEL_OK")
</pallas_src>

<mosaic_0001>
module attributes {stable_mosaic.version = 11 : i64} {
  func.func @linear_relu_kernel(%arg0: i32, %arg1: memref<16x16xf32, #tpu.memory_space<vmem>>, %arg2: memref<16x64xbf16, #tpu.memory_space<vmem>>, %arg3: memref<1x64xf32, #tpu.memory_space<vmem>>, %arg4: memref<16x64xf32, #tpu.memory_space<vmem>>) attributes {dimension_semantics = [#tpu.dimension_semantics<parallel>], iteration_bounds = array<i64: 3>, scalar_prefetch = 0 : i64, scratch_operands = 0 : i64, tpu.core_type = #tpu.core_type<tc>, window_params = [{transform_indices = @transform_0, window_bounds = array<i64: 16, 16>}, {pipeline_mode = #tpu.pipeline_mode<synchronous>, transform_indices = @transform_1, window_bounds = array<i64: 16, 64>}, {pipeline_mode = #tpu.pipeline_mode<synchronous>, transform_indices = @transform_2, window_bounds = array<i64: 1, 64>}, {transform_indices = @transform_3, window_bounds = array<i64: 16, 64>}]} {
    %c0 = arith.constant 0 : index
    %c0_0 = arith.constant 0 : index
    %0 = vector.load %arg1[%c0, %c0_0] : memref<16x16xf32, #tpu.memory_space<vmem>>, vector<16x16xf32>
    %1 = arith.truncf %0 : vector<16x16xf32> to vector<16x16xbf16>
    %c0_1 = arith.constant 0 : index
    %c0_2 = arith.constant 0 : index
    %2 = vector.load %arg2[%c0_1, %c0_2] : memref<16x64xbf16, #tpu.memory_space<vmem>>, vector<16x64xbf16>
    %cst = arith.constant dense<0.000000e+00> : vector<16x64xf32>
    %3 = tpu.matmul %1, %2, %cst {dimension_numbers = #tpu.dot_dimension_numbers<[1], [0], [0], [1], [0, 0, 1, 1], [], []>} : vector<16x16xbf16>, vector<16x64xbf16>, vector<16x64xf32> -> vector<16x64xf32>
    %c0_3 = arith.constant 0 : index
    %c0_4 = arith.constant 0 : index
    %4 = vector.load %arg3[%c0_3, %c0_4] : memref<1x64xf32, #tpu.memory_space<vmem>>, vector<1x64xf32>
    %5 = vector.broadcast %4 : vector<1x64xf32> to vector<16x64xf32>
    %6 = arith.addf %3, %5 : vector<16x64xf32>
    %cst_5 = arith.constant 0.000000e+00 : f32
    %7 = vector.broadcast %cst_5 : f32 to vector<16x64xf32>
    %8 = arith.maximumf %6, %7 : vector<16x64xf32>
    %c0_6 = arith.constant 0 : index
    %c0_7 = arith.constant 0 : index
    %9 = vector.load %arg4[%c0_6, %c0_7] : memref<16x64xf32, #tpu.memory_space<vmem>>, vector<16x64xf32>
    tpu.vector_store %arg4[%c0_6, %c0_7], %8 {strides = array<i32>} : memref<16x64xf32, #tpu.memory_space<vmem>>, vector<16x64xf32>,
    return
  }
  func.func @transform_0(%arg0: i32) -> (i32, i32) {
    %c0_i32 = arith.constant 0 : i32
    %c0_i32_0 = arith.constant 0 : i32
    return %arg0, %c0_i32 : i32, i32
  }
  func.func @transform_1(%arg0: i32) -> (i32, i32) {
    %c0_i32 = arith.constant 0 : i32
    %c0_i32_0 = arith.constant 0 : i32
    %c0_i32_1 = arith.constant 0 : i32
    return %c0_i32, %c0_i32_0 : i32, i32
  }
  func.func @transform_2(%arg0: i32) -> (i32, i32) {
    %c0_i32 = arith.constant 0 : i32
    %c0_i32_0 = arith.constant 0 : i32
    %c0_i32_1 = arith.constant 0 : i32
    return %c0_i32, %c0_i32_0 : i32, i32
  }
  func.func @transform_3(%arg0: i32) -> (i32, i32) {
    %c0_i32 = arith.constant 0 : i32
    %c0_i32_0 = arith.constant 0 : i32
    return %arg0, %c0_i32 : i32, i32
  }
}

module attributes {stable_mosaic.version = 11 : i64} {
  func.func @gcn2_layer_kernel(%arg0: i32, %arg1: memref<16x48xbf16, #tpu.memory_space<vmem>>, %arg2: memref<48x64xf32, #tpu.memory_space<vmem>>, %arg3: memref<16x64xf32, #tpu.memory_space<vmem>>, %arg4: memref<64x64xbf16, #tpu.memory_space<vmem>>, %arg5: memref<16x64xf32, #tpu.memory_space<vmem>>) attributes {dimension_semantics = [#tpu.dimension_semantics<parallel>], iteration_bounds = array<i64: 3>, scalar_prefetch = 0 : i64, scratch_operands = 0 : i64, tpu.core_type = #tpu.core_type<tc>, window_params = [{transform_indices = @transform_0, window_bounds = array<i64: 16, 48>}, {pipeline_mode = #tpu.pipeline_mode<synchronous>, transform_indices = @transform_1, window_bounds = array<i64: 48, 64>}, {transform_indices = @transform_2, window_bounds = array<i64: 16, 64>}, {pipeline_mode = #tpu.pipeline_mode<synchronous>, transform_indices = @transform_3, window_bounds = array<i64: 64, 64>}, {transform_indices = @transform_4, window_bounds = array<i64: 16, 64>}]} {
    %c0 = arith.constant 0 : index
    %c0_0 = arith.constant 0 : index
    %0 = vector.load %arg1[%c0, %c0_0] : memref<16x48xbf16, #tpu.memory_space<vmem>>, vector<16x48xbf16>
    %c0_1 = arith.constant 0 : index
    %c0_2 = arith.constant 0 : index
    %1 = vector.load %arg2[%c0_1, %c0_2] : memref<48x64xf32, #tpu.memory_space<vmem>>, vector<48x64xf32>
    %2 = arith.truncf %1 : vector<48x64xf32> to vector<48x64xbf16>
    %cst = arith.constant dense<0.000000e+00> : vector<16x64xf32>
    %3 = tpu.matmul %0, %2, %cst {dimension_numbers = #tpu.dot_dimension_numbers<[1], [0], [0], [1], [0, 0, 1, 1], [], []>} : vector<16x48xbf16>, vector<48x64xbf16>, vector<16x64xf32> -> vector<16x64xf32>
    %c0_3 = arith.constant 0 : index
    %c0_4 = arith.constant 0 : index
    %4 = vector.load %arg3[%c0_3, %c0_4] : memref<16x64xf32, #tpu.memory_space<vmem>>, vector<16x64xf32>
    %5 = arith.addf %3, %4 : vector<16x64xf32>
    %6 = arith.truncf %5 : vector<16x64xf32> to vector<16x64xbf16>
    %c0_5 = arith.constant 0 : index
    %c0_6 = arith.constant 0 : index
    %7 = vector.load %arg4[%c0_5, %c0_6] : memref<64x64xbf16, #tpu.memory_space<vmem>>, vector<64x64xbf16>
    %cst_7 = arith.constant dense<0.000000e+00> : vector<16x64xf32>
    %8 = tpu.matmul %6, %7, %cst_7 {dimension_numbers = #tpu.dot_dimension_numbers<[1], [0], [0], [1], [0, 0, 1, 1], [], []>} : vector<16x64xbf16>, vector<64x64xbf16>, vector<16x64xf32> -> vector<16x64xf32>
    %9 = arith.addf %5, %8 : vector<16x64xf32>
    %cst_8 = arith.constant 0.000000e+00 : f32
    %10 = vector.broadcast %cst_8 : f32 to vector<16x64xf32>
    %11 = arith.maximumf %9, %10 : vector<16x64xf32>
    %c0_9 = arith.constant 0 : index
    %c0_10 = arith.constant 0 : index
    %12 = vector.load %arg5[%c0_9, %c0_10] : memref<16x64xf32, #tpu.memory_space<vmem>>, vector<16x64xf32>
    tpu.vector_store %arg5[%c0_9, %c0_10], %11 {strides = array<i32>} : memref<16x64xf32, #tpu.memory_space<vmem>>, vector<16x64xf32>,
    return
  }
  func.func @transform_0(%arg0: i32) -> (i32, i32) {
    %c0_i32 = arith.constant 0 : i32
    %c0_i32_0 = arith.constant 0 : i32
    return %arg0, %c0_i32 : i32, i32
  }
  func.func @transform_1(%arg0: i32) -> (i32, i32) {
    %c0_i32 = arith.constant 0 : i32
    %c0_i32_0 = arith.constant 0 : i32
    %c0_i32_1 = arith.constant 0 : i32
    return %c0_i32, %c0_i32_0 : i32, i32
  }
  func.func @transform_2(%arg0: i32) -> (i32, i32) {
    %c0_i32 = arith.constant 0 : i32
    %c0_i32_0 = arith.constant 0 : i32
    return %arg0, %c0_i32 : i32, i32
  }
  func.func @transform_3(%arg0: i32) -> (i32, i32) {
    %c0_i32 = arith.constant 0 : i32
    %c0_i32_0 = arith.constant 0 : i32
    %c0_i32_1 = arith.constant 0 : i32
    return %c0_i32, %c0_i32_0 : i32, i32
  }
  func.func @transform_4(%arg0: i32) -> (i32, i32) {
    %c0_i32 = arith.constant 0 : i32
    %c0_i32_0 = arith.constant 0 : i32
    return %arg0, %c0_i32 : i32, i32
  }
}

module attributes {stable_mosaic.version = 11 : i64} {
  func.func @linear_logsoftmax_kernel(%arg0: i32, %arg1: memref<16x64xf32, #tpu.memory_space<vmem>>, %arg2: memref<64x128xbf16, #tpu.memory_space<vmem>>, %arg3: memref<1x128xf32, #tpu.memory_space<vmem>>, %arg4: memref<16x128xf32, #tpu.memory_space<vmem>>) attributes {dimension_semantics = [#tpu.dimension_semantics<parallel>], iteration_bounds = array<i64: 3>, scalar_prefetch = 0 : i64, scratch_operands = 0 : i64, tpu.core_type = #tpu.core_type<tc>, window_params = [{transform_indices = @transform_0, window_bounds = array<i64: 16, 64>}, {pipeline_mode = #tpu.pipeline_mode<synchronous>, transform_indices = @transform_1, window_bounds = array<i64: 64, 128>}, {pipeline_mode = #tpu.pipeline_mode<synchronous>, transform_indices = @transform_2, window_bounds = array<i64: 1, 128>}, {transform_indices = @transform_3, window_bounds = array<i64: 16, 128>}]} {
    %c0 = arith.constant 0 : index
    %c0_0 = arith.constant 0 : index
    %0 = vector.load %arg1[%c0, %c0_0] : memref<16x64xf32, #tpu.memory_space<vmem>>, vector<16x64xf32>
    %1 = arith.truncf %0 : vector<16x64xf32> to vector<16x64xbf16>
    %c0_1 = arith.constant 0 : index
    %c0_2 = arith.constant 0 : index
    %2 = vector.load %arg2[%c0_1, %c0_2] : memref<64x128xbf16, #tpu.memory_space<vmem>>, vector<64x128xbf16>
    %cst = arith.constant dense<0.000000e+00> : vector<16x128xf32>
    %3 = tpu.matmul %1, %2, %cst {dimension_numbers = #tpu.dot_dimension_numbers<[1], [0], [0], [1], [0, 0, 1, 1], [], []>} : vector<16x64xbf16>, vector<64x128xbf16>, vector<16x128xf32> -> vector<16x128xf32>
    %c0_3 = arith.constant 0 : index
    %c0_4 = arith.constant 0 : index
    %4 = vector.load %arg3[%c0_3, %c0_4] : memref<1x128xf32, #tpu.memory_space<vmem>>, vector<1x128xf32>
    %5 = vector.broadcast %4 : vector<1x128xf32> to vector<16x128xf32>
    %6 = arith.addf %3, %5 : vector<16x128xf32>
    %cst_5 = arith.constant dense<0xFF800000> : vector<16xf32>
    %7 = vector.multi_reduction <maximumf>, %6, %cst_5 [1] : vector<16x128xf32> to vector<16xf32>
    %8 = vector.shape_cast %7 : vector<16xf32> to vector<16x1xf32>
    %9 = vector.broadcast %8 : vector<16x1xf32> to vector<16x128xf32>
    %10 = arith.subf %6, %9 : vector<16x128xf32>
    %11 = math.exp %10 : vector<16x128xf32>
    %cst_6 = arith.constant dense<0.000000e+00> : vector<16xf32>
    %12 = vector.multi_reduction <add>, %11, %cst_6 [1] : vector<16x128xf32> to vector<16xf32>
    %13 = vector.shape_cast %12 : vector<16xf32> to vector<16x1xf32>
    %14 = math.log %13 : vector<16x1xf32>
    %15 = vector.broadcast %14 : vector<16x1xf32> to vector<16x128xf32>
    %16 = arith.subf %10, %15 : vector<16x128xf32>
    %c0_7 = arith.constant 0 : index
    %c0_8 = arith.constant 0 : index
    %17 = vector.load %arg4[%c0_7, %c0_8] : memref<16x128xf32, #tpu.memory_space<vmem>>, vector<16x128xf32>
    tpu.vector_store %arg4[%c0_7, %c0_8], %16 {strides = array<i32>} : memref<16x128xf32, #tpu.memory_space<vmem>>, vector<16x128xf32>,
    return
  }
  func.func @transform_0(%arg0: i32) -> (i32, i32) {
    %c0_i32 = arith.constant 0 : i32
    %c0_i32_0 = arith.constant 0 : i32
    return %arg0, %c0_i32 : i32, i32
  }
  func.func @transform_1(%arg0: i32) -> (i32, i32) {
    %c0_i32 = arith.constant 0 : i32
    %c0_i32_0 = arith.constant 0 : i32
    %c0_i32_1 = arith.constant 0 : i32
    return %c0_i32, %c0_i32_0 : i32, i32
  }
  func.func @transform_2(%arg0: i32) -> (i32, i32) {
    %c0_i32 = arith.constant 0 : i32
    %c0_i32_0 = arith.constant 0 : i32
    %c0_i32_1 = arith.constant 0 : i32
    return %c0_i32, %c0_i32_0 : i32, i32
  }
  func.func @transform_3(%arg0: i32) -> (i32, i32) {
    %c0_i32 = arith.constant 0 : i32
    %c0_i32_0 = arith.constant 0 : i32
    return %arg0, %c0_i32 : i32, i32
  }
}

</mosaic_0001>

<llo_original>
// kernel: gcniinet_forward.23
$region0: #{gcniinet_forward.23}
  #allocation0 [shape = 'u32[]', space=smem, size = 0x4, offset = 0x4, fixed_abs, tag = 'smem constant byte address 0x4 - core index']
  #allocation1 [shape = 'u32[144,128]{1,0:T(1,128)}', space=vmem, size = 0x12000, scoped, tag = 'internal scratch']
  %s0 = inlined_call_operand.vmem [shape: bf16[48,48], index: 0, kind: input, shape index: {}]
  %s1 = inlined_call_operand.vmem [shape: f32[48,64], index: 1, kind: input, shape index: {}]
  %s2 = inlined_call_operand.vmem [shape: f32[48,64], index: 2, kind: input, shape index: {}]
  %s3 = inlined_call_operand.vmem [shape: bf16[64,64], index: 3, kind: input, shape index: {}]
  %s4 = inlined_call_operand.vmem [shape: f32[48,64], index: 4, kind: output, shape index: {}]
  %s5 = sld [smem:[#allocation0]]
  $region49: #{gcniinet_forward.23} parent=0
    _
  %s7 = ssub.s32 1, %s5
  %s8 = scalar_select 0, %s7, %s5
  loop: start=0, step=1, limit=5
  $region2: #{gcniinet_forward.23} parent=0 // loop_pre_header
    _
  $region3: #{gcniinet_forward.23} parent=0 // loop_header
    %s10 = sphi 0, %s14
    %p11 = scmp.ge.s32.totalorder %s10, 5
    %s20 = sphi 0, %s22
    %s23 = sphi 0, %s20
    %s24 = sphi 0, %s23
    %s40 = sphi 0, %s24
    %s44 = sphi 0, %s44
    %s46 = sphi 0, %s44
    %s47 = sphi 0, %s46
    %s61 = sphi 0, %s47
    %s67 = sphi 0, %s69
    %s70 = sphi 0, %s67
    %s71 = sphi 0, %s70
    %s87 = sphi 0, %s71
    %s91 = sphi 0, %s91
    %s93 = sphi 0, %s91
    %s94 = sphi 0, %s93
    %s108 = sphi 0, %s94
    %s114 = sphi 0, %s116
    %s117 = sphi 0, %s114
    %s118 = sphi 0, %s117
    %s134 = sphi 0, %s118
  $region4: #{gcniinet_forward.23} parent=0 // loop_header_branch
    %13 = sbr.rel (%p11) target = $region8
  $region5: #{gcniinet_forward.23} parent=0 // loop_body
    %s15 = ssub.s32 %s10, 1
    %s16 = ssub.s32 %s10, 2
    %s17 = sadd.s32 %s10, 1
    %s18 = ssub.s32 %s10, %s17
    %p19 = scmp.eq.s32.totalorder %s18, 0
    %s21 = sadd.s32 %s20, 1
    %s22 = scalar_select %p19, %s20, %s21
    %p25 = pneg %p19
    %p26 = scmp.eq.s32.totalorder %s10, 2
    %p27 = por %p25, %p26
    %p28 = scmp.ne.s32.totalorder %s20, %s23
    %p29 = scmp.eq.s32.totalorder %s10, 0
    %p30 = por %p28, %p29
    %p31 = scmp.ne.s32.totalorder %s20, %s23
    %p32 = scmp.eq.s32.totalorder %s15, 2
    %p33 = por %p31, %p32
    %p34 = scmp.ne.s32.totalorder %s23, %s24
    %p35 = scmp.eq.s32.totalorder %s15, 0
    %p36 = por %p34, %p35
    %p37 = scmp.ne.s32.totalorder %s23, %s24
    %p38 = scmp.eq.s32.totalorder %s16, 2
    %p39 = por %p37, %p38
    %p41 = scmp.ne.s32.totalorder %s24, %s40
    %p42 = scmp.eq.s32.totalorder %s16, 0
    %p43 = por %p41, %p42
    %s45 = sadd.s32 %s44, 1
    %p48 = scmp.eq.s32.totalorder %s10, 2
    %p49 = scmp.ne.s32.totalorder %s44, %s46
    %p50 = scmp.eq.s32.totalorder %s10, 0
    %p51 = por %p49, %p50
    %p52 = scmp.ne.s32.totalorder %s44, %s46
    %p53 = scmp.eq.s32.totalorder %s15, 2
    %p54 = por %p52, %p53
    %p55 = scmp.ne.s32.totalorder %s46, %s47
    %p56 = scmp.eq.s32.totalorder %s15, 0
    %p57 = por %p55, %p56
    %p58 = scmp.ne.s32.totalorder %s46, %s47
    %p59 = scmp.eq.s32.totalorder %s16, 2
    %p60 = por %p58, %p59
    %p62 = scmp.ne.s32.totalorder %s47, %s61
    %p63 = scmp.eq.s32.totalorder %s16, 0
    %p64 = por %p62, %p63
    %s65 = ssub.s32 %s10, %s17
    %p66 = scmp.eq.s32.totalorder %s65, 0
    %s68 = sadd.s32 %s67, 1
    %s69 = scalar_select %p66, %s67, %s68
    %p72 = pneg %p66
    %p73 = scmp.eq.s32.totalorder %s10, 2
    %p74 = por %p72, %p73
    %p75 = scmp.ne.s32.totalorder %s67, %s70
    %p76 = scmp.eq.s32.totalorder %s10, 0
    %p77 = por %p75, %p76
    %p78 = scmp.ne.s32.totalorder %s67, %s70
    %p79 = scmp.eq.s32.totalorder %s15, 2
    %p80 = por %p78, %p79
    %p81 = scmp.ne.s32.totalorder %s70, %s71
    %p82 = scmp.eq.s32.totalorder %s15, 0
    %p83 = por %p81, %p82
    %p84 = scmp.ne.s32.totalorder %s70, %s71
    %p85 = scmp.eq.s32.totalorder %s16, 2
    %p86 = por %p84, %p85
    %p88 = scmp.ne.s32.totalorder %s71, %s87
    %p89 = scmp.eq.s32.totalorder %s16, 0
    %p90 = por %p88, %p89
    %s92 = sadd.s32 %s91, 1
    %p95 = scmp.eq.s32.totalorder %s10, 2
    %p96 = scmp.ne.s32.totalorder %s91, %s93
    %p97 = scmp.eq.s32.totalorder %s10, 0
    %p98 = por %p96, %p97
    %p99 = scmp.ne.s32.totalorder %s91, %s93
    %p100 = scmp.eq.s32.totalorder %s15, 2
    %p101 = por %p99, %p100
    %p102 = scmp.ne.s32.totalorder %s93, %s94
    %p103 = scmp.eq.s32.totalorder %s15, 0
    %p104 = por %p102, %p103
    %p105 = scmp.ne.s32.totalorder %s93, %s94
    %p106 = scmp.eq.s32.totalorder %s16, 2
    %p107 = por %p105, %p106
    %p109 = scmp.ne.s32.totalorder %s94, %s108
    %p110 = scmp.eq.s32.totalorder %s16, 0
    %p111 = por %p109, %p110
    %s112 = ssub.s32 %s10, %s17
    %p113 = scmp.eq.s32.totalorder %s112, 0
    %s115 = sadd.s32 %s114, 1
    %s116 = scalar_select %p113, %s114, %s115
    %p119 = pneg %p113
    %p120 = scmp.eq.s32.totalorder %s10, 2
    %p121 = por %p119, %p120
    %p122 = scmp.ne.s32.totalorder %s114, %s117
    %p123 = scmp.eq.s32.totalorder %s10, 0
    %p124 = por %p122, %p123
    %p125 = scmp.ne.s32.totalorder %s114, %s117
    %p126 = scmp.eq.s32.totalorder %s15, 2
    %p127 = por %p125, %p126
    %p128 = scmp.ne.s32.totalorder %s117, %s118
    %p129 = scmp.eq.s32.totalorder %s15, 0
    %p130 = por %p128, %p129
    %p131 = scmp.ne.s32.totalorder %s117, %s118
    %p132 = scmp.eq.s32.totalorder %s16, 2
    %p133 = por %p131, %p132
    %p135 = scmp.ne.s32.totalorder %s118, %s134
    %p136 = scmp.eq.s32.totalorder %s16, 0
    %p137 = por %p135, %p136
    %p138 = scmp.le.s32.totalorder 1, %s10
    %p139 = scmp.lt.s32.totalorder %s10, 4
    %p140 = pnand %p138, %p139
    %p141 = pneg %p140
    // Predicated region
    $region9: #{gcniinet_forward.23} parent=5 // pred_check
      _
    $region10: #{gcniinet_forward.23} parent=5 // pred_check_branch
      %143 = sbr.rel (%p140) target = $region12
    $region11: #{gcniinet_forward.23} parent=5 // pred_region
      %s144 = ssub.s32 %s10, 1
      // Predicated region
      $region13: #{gcniinet_forward.23} parent=11 // pred_check
        %p145 = pneg %p57
      $region14: #{gcniinet_forward.23} parent=11 // pred_check_branch
        %147 = sbr.rel (%p145) target = $region16
      $region15: #{gcniinet_forward.23} parent=11 // pred_region
        _
      $region16: #{gcniinet_forward.23} parent=11 // pred_fallthru
        _
      // Predicated region
      $region17: #{gcniinet_forward.23} parent=11 // pred_check
        %p148 = pneg %p104
      $region18: #{gcniinet_forward.23} parent=11 // pred_check_branch
        %150 = sbr.rel (%p148) target = $region20
      $region19: #{gcniinet_forward.23} parent=11 // pred_region
        _
      $region20: #{gcniinet_forward.23} parent=11 // pred_fallthru
        _
    $region12: #{gcniinet_forward.23} parent=5 // pred_fallthru
      _
    %p151 = scmp.lt.s32.totalorder %s10, 3
    // Predicated region
    $region21: #{gcniinet_forward.23} parent=5 // pred_check
      %p152 = pneg %p151
    $region22: #{gcniinet_forward.23} parent=5 // pred_check_branch
      %154 = sbr.rel (%p152) target = $region24
    $region23: #{gcniinet_forward.23} parent=5 // pred_region
      // Predicated region
      $region25: #{gcniinet_forward.23} parent=23 // pred_check
        %p155 = pneg %p30
      $region26: #{gcniinet_forward.23} parent=23 // pred_check_branch
        %157 = sbr.rel (%p155) target = $region28
      $region27: #{gcniinet_forward.23} parent=23 // pred_region
        %s158 = smul.u32 2, %s10
        %p159 = scmp.lt.s32.totalorder %s158, 5
        %s160 = scalar_select %p159, %s158, 5
        %s161 = smul.addr %s160, 4
        %s162 = scalar_lea.vmem %s0, %s161
        %s163 = smul.u32 2, %s10
      $region28: #{gcniinet_forward.23} parent=23 // pred_fallthru
        _
      // Predicated region
      $region29: #{gcniinet_forward.23} parent=23 // pred_check
        %p164 = pneg %p77
      $region30: #{gcniinet_forward.23} parent=23 // pred_check_branch
        %166 = sbr.rel (%p164) target = $region32
      $region31: #{gcniinet_forward.23} parent=23 // pred_region
        %s167 = smul.u32 2, %s10
        %p168 = scmp.lt.s32.totalorder %s167, 5
        %s169 = scalar_select %p168, %s167, 5
        %s170 = smul.addr %s169, 8
        %s171 = scalar_lea.vmem %s2, %s170
        %s172 = smul.u32 2, %s10
      $region32: #{gcniinet_forward.23} parent=23 // pred_fallthru
        _
    $region24: #{gcniinet_forward.23} parent=5 // pred_fallthru
      _
    %p173 = scmp.le.s32.totalorder 1, %s10
    %p174 = scmp.lt.s32.totalorder %s10, 4
    %p175 = pnand %p173, %p174
    %p176 = pneg %p175
    // Predicated region
    $region33: #{gcniinet_forward.23} parent=5 // pred_check
      _
    $region34: #{gcniinet_forward.23} parent=5 // pred_check_branch
      %178 = sbr.rel (%p175) target = $region36
    $region35: #{gcniinet_forward.23} parent=5 // pred_region
      %s179 = ssub.s32 %s10, 1
      %s180 = smul.u32 2, %s15
      %p181 = scmp.lt.s32.totalorder %s180, 5
      %s182 = scalar_select %p181, %s180, 5
      %s183 = smul.addr %s182, 4
      %s184 = scalar_lea.vmem %s0, %s183
      %p185 = pneg %p36
      %p186 = pneg %p33
      %p187 = pneg %p57
      %p188 = pneg %p54
      %s189 = smul.u32 2, %s15
      %p190 = scmp.lt.s32.totalorder %s189, 5
      %s191 = scalar_select %p190, %s189, 5
      %s192 = smul.addr %s191, 8
      %s193 = scalar_lea.vmem %s2, %s192
      %p194 = pneg %p83
      %p195 = pneg %p80
      %p196 = pneg %p104
      %p197 = pneg %p101
      %p198 = pneg %p130
      %p199 = pneg %p127
      %s200 = smul.u32 2, %s15
      %p201 = scmp.lt.s32.totalorder %s200, 5
      %s202 = scalar_select %p201, %s200, 5
      %s203 = smul.addr %s202, 8
      %s204 = scalar_lea.vmem %s4, %s203
      %s205 = smul.u32 2, %s15
      %p206 = scmp.lt.s32.totalorder %s205, 5
      %s207 = scalar_select %p206, %s205, 5
      %s208 = smul.addr %s207, 4
      %s209 = scalar_lea.vmem %s0, %s208
      %s210 = smul.u32 2, %s15
      %s211 = smul.u32 2, %s15
      %p212 = scmp.lt.s32.totalorder %s211, 5
      %s213 = scalar_select %p212, %s211, 5
      %s214 = smul.addr %s213, 8
      %s215 = scalar_lea.vmem %s2, %s214
      %s216 = smul.u32 2, %s15
      %s217 = smul.u32 2, %s15
      %p218 = scmp.lt.s32.totalorder %s217, 5
      %s219 = scalar_select %p218, %s217, 5
      %s220 = smul.addr %s219, 8
      %s221 = scalar_lea.vmem %s4, %s220
      %s222 = smul.u32 2, %s15
      %v224 = vld [vmem:[%s209] sm:$0xf]
      %v225 = vld [vmem:[%s209 + $0x4] sm:$0xf]
      %v226 = vld [vmem:[%s1] sm:$0xff]
      %v227 = vld [vmem:[%s1 + $0x8] sm:$0xff]
      %v228 = vld [vmem:[%s1 + $0x10] sm:$0xff]
      %v229 = vld [vmem:[%s1 + $0x18] sm:$0xff]
      %v230 = vld [vmem:[%s1 + $0x20] sm:$0xff]
      %v231 = vld [vmem:[%s1 + $0x28] sm:$0xff]
      %v232 = vpack.c.bf16 %v227, %v226
      %v233 = vpack.c.bf16 %v229, %v228
      %v234 = vpack.c.bf16 %v231, %v230
      %v235 = vld [vmem:[%s215] sm:$0xff]
      %v236 = vld [vmem:[%s215 + $0x8] sm:$0xff]
      %v239 = vunpack.c.l.b16 %v224
      %v240 = vunpack.c.l.b16 %v225
      %v241 = vpack.c.b16 %v240, %v239
      %vm242 = vcmask 392192
      %v244 = vsel %vm242, %v241, 0
      %246 = vmatprep.subr.bf16.mxu0 0
      %247 = vmatpush1.bf16.msra.mxu0 %v232
      %248 = vmatprep.subr.bf16.mxu0 0
      %249 = vmatpush1.bf16.msra.mxu0 %v233
      %250 = vmatprep.subr.bf16.mxu0 0
      %251 = vmatpush1.bf16.msra.mxu0 %v234
      %252 = vmatprep.subr.bf16.mxu0 0
      %253 = vmatpush1.bf16.msra.mxu0 0
      %254 = vmatprep.subr.bf16.mxu0 0
      %255 = vmatpush1.bf16.msra.mxu0 0
      %256 = vmatprep.subr.bf16.mxu0 0
      %257 = vmatpush1.bf16.msra.mxu0 0
      %258 = vmatprep.subr.bf16.mxu0 0
      %259 = vmatpush1.bf16.msra.mxu0 0
      %260 = vmatprep.subr.bf16.mxu0 0
      %261 = vmatpush1.bf16.msra.mxu0 0
      %262 = vmatprep.subr.bf16.mxu0 0
      %263 = vmatpush1.bf16.msra.mxu0 0
      %264 = vmatprep.subr.bf16.mxu0 0
      %265 = vmatpush1.bf16.msra.mxu0 0
      %266 = vmatprep.subr.bf16.mxu0 0
      %267 = vmatpush1.bf16.msra.mxu0 0
      %268 = vmatprep.subr.bf16.mxu0 0
      %269 = vmatpush1.bf16.msra.mxu0 0
      %270 = vmatprep.subr.bf16.mxu0 0
      %271 = vmatpush1.bf16.msra.mxu0 0
      %272 = vmatprep.subr.bf16.mxu0 0
      %273 = vmatpush1.bf16.msra.mxu0 0
      %274 = vmatprep.subr.bf16.mxu0 0
      %275 = vmatpush1.bf16.msra.mxu0 0
      %276 = vmatprep.subr.bf16.mxu0 0
      %277 = vmatpush1.bf16.msra.mxu0 0
      %278 = vmatprep.mubr.bf16.mxu0 0
      %279 = vmatmul.mubr.bf16.gmra.mrb[0].mxu0 %v244
      %v280 = vpop.f32.mrb[0].mxu0
      %v281 = vadd.f32 %v235, %v280
      %v282 = vpop.f32.mrb[0].mxu0
      %v283 = vpop.f32.mrb[0].mxu0
      %v284 = vadd.f32 %v236, %v283
      %v285 = vpop.f32.mrb[0].mxu0
      %286 = vdwg.mxu0
      %v287 = vpack.c.bf16 %v284, %v281
      %v288 = vld [vmem:[%s3] sm:$0xf]
      %v289 = vld [vmem:[%s3 + $0x4] sm:$0xf]
      %v290 = vld [vmem:[%s3 + $0x8] sm:$0xf]
      %v291 = vld [vmem:[%s3 + $0xc] sm:$0xf]
      %v292 = vld [vmem:[%s3 + $0x10] sm:$0xf]
      %v293 = vld [vmem:[%s3 + $0x14] sm:$0xf]
      %v294 = vld [vmem:[%s3 + $0x18] sm:$0xf]
      %v295 = vld [vmem:[%s3 + $0x1c] sm:$0xf]
      %v304 = vunpack.c.l.b16 %v288
      %v305 = vunpack.c.l.b16 %v289
      %v306 = vunpack.c.l.b16 %v290
      %v307 = vunpack.c.l.b16 %v291
      %v308 = vunpack.c.l.b16 %v292
      %v309 = vunpack.c.l.b16 %v293
      %v310 = vunpack.c.l.b16 %v294
      %v311 = vunpack.c.l.b16 %v295
      %v312 = vpack.c.b16 %v305, %v304
      %v313 = vpack.c.b16 %v307, %v306
      %v314 = vpack.c.b16 %v309, %v308
      %v315 = vpack.c.b16 %v311, %v310
      %vm320 = vcmask 523264
      %v322 = vsel %vm320, %v287, 0
      %324 = vmatprep.subr.bf16.mxu0 0
      %325 = vmatpush1.bf16.msra.mxu0 %v312
      %326 = vmatprep.subr.bf16.mxu0 0
      %327 = vmatpush1.bf16.msra.mxu0 %v313
      %328 = vmatprep.subr.bf16.mxu0 0
      %329 = vmatpush1.bf16.msra.mxu0 %v314
      %330 = vmatprep.subr.bf16.mxu0 0
      %331 = vmatpush1.bf16.msra.mxu0 %v315
      %332 = vmatprep.subr.bf16.mxu0 0
      %333 = vmatpush1.bf16.msra.mxu0 0
      %334 = vmatprep.subr.bf16.mxu0 0
      %335 = vmatpush1.bf16.msra.mxu0 0
      %336 = vmatprep.subr.bf16.mxu0 0
      %337 = vmatpush1.bf16.msra.mxu0 0
      %338 = vmatprep.subr.bf16.mxu0 0
      %339 = vmatpush1.bf16.msra.mxu0 0
      %340 = vmatprep.subr.bf16.mxu0 0
      %341 = vmatpush1.bf16.msra.mxu0 0
      %342 = vmatprep.subr.bf16.mxu0 0
      %343 = vmatpush1.bf16.msra.mxu0 0
      %344 = vmatprep.subr.bf16.mxu0 0
      %345 = vmatpush1.bf16.msra.mxu0 0
      %346 = vmatprep.subr.bf16.mxu0 0
      %347 = vmatpush1.bf16.msra.mxu0 0
      %348 = vmatprep.subr.bf16.mxu0 0
      %349 = vmatpush1.bf16.msra.mxu0 0
      %350 = vmatprep.subr.bf16.mxu0 0
      %351 = vmatpush1.bf16.msra.mxu0 0
      %352 = vmatprep.subr.bf16.mxu0 0
      %353 = vmatpush1.bf16.msra.mxu0 0
      %354 = vmatprep.subr.bf16.mxu0 0
      %355 = vmatpush1.bf16.msra.mxu0 0
      %356 = vmatprep.mubr.bf16.mxu0 0
      %357 = vmatmul.mubr.bf16.gmra.mrb[0].mxu0 %v322
      %v358 = vpop.f32.mrb[0].mxu0
      %v359 = vadd.f32 0.0, %v358
      %v360 = vpop.f32.mrb[0].mxu0
      %v361 = vpop.f32.mrb[0].mxu0
      %v362 = vadd.f32 0.0, %v361
      %v363 = vpop.f32.mrb[0].mxu0
      %364 = vdwg.mxu0
      %v365 = vadd.f32 %v281, %v359
      %v366 = vadd.f32 %v284, %v362
      %v367 = vmax.f32 %v365, 0.0
      %v368 = vmax.f32 %v366, 0.0
      %369 = vst.msk [vmem:[%s221] sm:$0xff] %vm320, %v367
      %370 = vst.msk [vmem:[%s221 + $0x8] sm:$0xff] %vm320, %v368
      %s371 = smul.u32 2, %s15
      %p372 = scmp.lt.s32.totalorder %s371, 5
      %s373 = scalar_select %p372, %s371, 5
      %s374 = smul.addr %s373, 8
      %s375 = scalar_lea.vmem %s4, %s374
      // Predicated region
      $region37: #{gcniinet_forward.23} parent=35 // pred_check
        %p376 = pneg %p127
      $region38: #{gcniinet_forward.23} parent=35 // pred_check_branch
        %378 = sbr.rel (%p376) target = $region40
      $region39: #{gcniinet_forward.23} parent=35 // pred_region
        %s379 = smul.u32 2, %s15
      $region40: #{gcniinet_forward.23} parent=35 // pred_fallthru
        _
    $region36: #{gcniinet_forward.23} parent=5 // pred_fallthru
      _
    %p380 = scmp.le.s32.totalorder 2, %s10
    // Predicated region
    $region41: #{gcniinet_forward.23} parent=5 // pred_check
      %p381 = pneg %p380
    $region42: #{gcniinet_forward.23} parent=5 // pred_check_branch
      %383 = sbr.rel (%p381) target = $region44
    $region43: #{gcniinet_forward.23} parent=5 // pred_region
      %s384 = ssub.s32 %s10, 2
      // Predicated region
      $region45: #{gcniinet_forward.23} parent=43 // pred_check
        %p385 = pneg %p133
      $region46: #{gcniinet_forward.23} parent=43 // pred_check_branch
        %387 = sbr.rel (%p385) target = $region48
      $region47: #{gcniinet_forward.23} parent=43 // pred_region
        %s388 = smul.u32 2, %s16
        %p389 = scmp.lt.s32.totalorder %s388, 5
        %s390 = scalar_select %p389, %s388, 5
        %s391 = smul.addr %s390, 8
        %s392 = scalar_lea.vmem %s4, %s391
      $region48: #{gcniinet_forward.23} parent=43 // pred_fallthru
        _
    $region44: #{gcniinet_forward.23} parent=5 // pred_fallthru
      _
  $region6: #{gcniinet_forward.23} parent=0 // loop_footer
    %s14 = sadd.s32 1, %s10
  $region7: #{gcniinet_forward.23} parent=0 // loop_footer_branch
    %9 = sbr.rel target = $region3
  $region8: #{gcniinet_forward.23} parent=0 // loop_exit
    _

// kernel: gcniinet_forward.22
$region0: #{gcniinet_forward.22}
  #allocation0 [shape = 'u32[]', space=smem, size = 0x4, offset = 0x4, fixed_abs, tag = 'smem constant byte address 0x4 - core index']
  #allocation1 [shape = 'u32[144,128]{1,0:T(1,128)}', space=vmem, size = 0x12000, scoped, tag = 'internal scratch']
  %s0 = inlined_call_operand.vmem [shape: f32[48,16], index: 0, kind: input, shape index: {}]
  %s1 = inlined_call_operand.vmem [shape: bf16[16,64], index: 1, kind: input, shape index: {}]
  %s2 = inlined_call_operand.vmem [shape: f32[1,64], index: 2, kind: input, shape index: {}]
  %s3 = inlined_call_operand.vmem [shape: f32[48,64], index: 3, kind: output, shape index: {}]
  %s4 = sld [smem:[#allocation0]]
  $region45: #{gcniinet_forward.22} parent=0
    _
  %s6 = ssub.s32 1, %s4
  %s7 = scalar_select 0, %s6, %s4
  loop: start=0, step=1, limit=5
  $region2: #{gcniinet_forward.22} parent=0 // loop_pre_header
    _
  $region3: #{gcniinet_forward.22} parent=0 // loop_header
    %s9 = sphi 0, %s13
    %p10 = scmp.ge.s32.totalorder %s9, 5
    %s19 = sphi 0, %s21
    %s22 = sphi 0, %s19
    %s23 = sphi 0, %s22
    %s39 = sphi 0, %s23
    %s43 = sphi 0, %s43
    %s45 = sphi 0, %s43
    %s46 = sphi 0, %s45
    %s60 = sphi 0, %s46
    %s64 = sphi 0, %s64
    %s66 = sphi 0, %s64
    %s67 = sphi 0, %s66
    %s81 = sphi 0, %s67
    %s87 = sphi 0, %s89
    %s90 = sphi 0, %s87
    %s91 = sphi 0, %s90
    %s107 = sphi 0, %s91
  $region4: #{gcniinet_forward.22} parent=0 // loop_header_branch
    %12 = sbr.rel (%p10) target = $region8
  $region5: #{gcniinet_forward.22} parent=0 // loop_body
    %s14 = ssub.s32 %s9, 1
    %s15 = ssub.s32 %s9, 2
    %s16 = sadd.s32 %s9, 1
    %s17 = ssub.s32 %s9, %s16
    %p18 = scmp.eq.s32.totalorder %s17, 0
    %s20 = sadd.s32 %s19, 1
    %s21 = scalar_select %p18, %s19, %s20
    %p24 = pneg %p18
    %p25 = scmp.eq.s32.totalorder %s9, 2
    %p26 = por %p24, %p25
    %p27 = scmp.ne.s32.totalorder %s19, %s22
    %p28 = scmp.eq.s32.totalorder %s9, 0
    %p29 = por %p27, %p28
    %p30 = scmp.ne.s32.totalorder %s19, %s22
    %p31 = scmp.eq.s32.totalorder %s14, 2
    %p32 = por %p30, %p31
    %p33 = scmp.ne.s32.totalorder %s22, %s23
    %p34 = scmp.eq.s32.totalorder %s14, 0
    %p35 = por %p33, %p34
    %p36 = scmp.ne.s32.totalorder %s22, %s23
    %p37 = scmp.eq.s32.totalorder %s15, 2
    %p38 = por %p36, %p37
    %p40 = scmp.ne.s32.totalorder %s23, %s39
    %p41 = scmp.eq.s32.totalorder %s15, 0
    %p42 = por %p40, %p41
    %s44 = sadd.s32 %s43, 1
    %p47 = scmp.eq.s32.totalorder %s9, 2
    %p48 = scmp.ne.s32.totalorder %s43, %s45
    %p49 = scmp.eq.s32.totalorder %s9, 0
    %p50 = por %p48, %p49
    %p51 = scmp.ne.s32.totalorder %s43, %s45
    %p52 = scmp.eq.s32.totalorder %s14, 2
    %p53 = por %p51, %p52
    %p54 = scmp.ne.s32.totalorder %s45, %s46
    %p55 = scmp.eq.s32.totalorder %s14, 0
    %p56 = por %p54, %p55
    %p57 = scmp.ne.s32.totalorder %s45, %s46
    %p58 = scmp.eq.s32.totalorder %s15, 2
    %p59 = por %p57, %p58
    %p61 = scmp.ne.s32.totalorder %s46, %s60
    %p62 = scmp.eq.s32.totalorder %s15, 0
    %p63 = por %p61, %p62
    %s65 = sadd.s32 %s64, 1
    %p68 = scmp.eq.s32.totalorder %s9, 2
    %p69 = scmp.ne.s32.totalorder %s64, %s66
    %p70 = scmp.eq.s32.totalorder %s9, 0
    %p71 = por %p69, %p70
    %p72 = scmp.ne.s32.totalorder %s64, %s66
    %p73 = scmp.eq.s32.totalorder %s14, 2
    %p74 = por %p72, %p73
    %p75 = scmp.ne.s32.totalorder %s66, %s67
    %p76 = scmp.eq.s32.totalorder %s14, 0
    %p77 = por %p75, %p76
    %p78 = scmp.ne.s32.totalorder %s66, %s67
    %p79 = scmp.eq.s32.totalorder %s15, 2
    %p80 = por %p78, %p79
    %p82 = scmp.ne.s32.totalorder %s67, %s81
    %p83 = scmp.eq.s32.totalorder %s15, 0
    %p84 = por %p82, %p83
    %s85 = ssub.s32 %s9, %s16
    %p86 = scmp.eq.s32.totalorder %s85, 0
    %s88 = sadd.s32 %s87, 1
    %s89 = scalar_select %p86, %s87, %s88
    %p92 = pneg %p86
    %p93 = scmp.eq.s32.totalorder %s9, 2
    %p94 = por %p92, %p93
    %p95 = scmp.ne.s32.totalorder %s87, %s90
    %p96 = scmp.eq.s32.totalorder %s9, 0
    %p97 = por %p95, %p96
    %p98 = scmp.ne.s32.totalorder %s87, %s90
    %p99 = scmp.eq.s32.totalorder %s14, 2
    %p100 = por %p98, %p99
    %p101 = scmp.ne.s32.totalorder %s90, %s91
    %p102 = scmp.eq.s32.totalorder %s14, 0
    %p103 = por %p101, %p102
    %p104 = scmp.ne.s32.totalorder %s90, %s91
    %p105 = scmp.eq.s32.totalorder %s15, 2
    %p106 = por %p104, %p105
    %p108 = scmp.ne.s32.totalorder %s91, %s107
    %p109 = scmp.eq.s32.totalorder %s15, 0
    %p110 = por %p108, %p109
    %p111 = scmp.le.s32.totalorder 1, %s9
    %p112 = scmp.lt.s32.totalorder %s9, 4
    %p113 = pnand %p111, %p112
    %p114 = pneg %p113
    // Predicated region
    $region9: #{gcniinet_forward.22} parent=5 // pred_check
      _
    $region10: #{gcniinet_forward.22} parent=5 // pred_check_branch
      %116 = sbr.rel (%p113) target = $region12
    $region11: #{gcniinet_forward.22} parent=5 // pred_region
      %s117 = ssub.s32 %s9, 1
      // Predicated region
      $region13: #{gcniinet_forward.22} parent=11 // pred_check
        %p118 = pneg %p56
      $region14: #{gcniinet_forward.22} parent=11 // pred_check_branch
        %120 = sbr.rel (%p118) target = $region16
      $region15: #{gcniinet_forward.22} parent=11 // pred_region
        _
      $region16: #{gcniinet_forward.22} parent=11 // pred_fallthru
        _
      // Predicated region
      $region17: #{gcniinet_forward.22} parent=11 // pred_check
        %p121 = pneg %p77
      $region18: #{gcniinet_forward.22} parent=11 // pred_check_branch
        %123 = sbr.rel (%p121) target = $region20
      $region19: #{gcniinet_forward.22} parent=11 // pred_region
        _
      $region20: #{gcniinet_forward.22} parent=11 // pred_fallthru
        _
    $region12: #{gcniinet_forward.22} parent=5 // pred_fallthru
      _
    %p124 = scmp.lt.s32.totalorder %s9, 3
    // Predicated region
    $region21: #{gcniinet_forward.22} parent=5 // pred_check
      %p125 = pneg %p124
    $region22: #{gcniinet_forward.22} parent=5 // pred_check_branch
      %127 = sbr.rel (%p125) target = $region24
    $region23: #{gcniinet_forward.22} parent=5 // pred_region
      // Predicated region
      $region25: #{gcniinet_forward.22} parent=23 // pred_check
        %p128 = pneg %p29
      $region26: #{gcniinet_forward.22} parent=23 // pred_check_branch
        %130 = sbr.rel (%p128) target = $region28
      $region27: #{gcniinet_forward.22} parent=23 // pred_region
        %s131 = smul.u32 2, %s9
        %p132 = scmp.lt.s32.totalorder %s131, 5
        %s133 = scalar_select %p132, %s131, 5
        %s134 = smul.addr %s133, 8
        %s135 = scalar_lea.vmem %s0, %s134
        %s136 = smul.u32 2, %s9
      $region28: #{gcniinet_forward.22} parent=23 // pred_fallthru
        _
    $region24: #{gcniinet_forward.22} parent=5 // pred_fallthru
      _
    %p137 = scmp.le.s32.totalorder 1, %s9
    %p138 = scmp.lt.s32.totalorder %s9, 4
    %p139 = pnand %p137, %p138
    %p140 = pneg %p139
    // Predicated region
    $region29: #{gcniinet_forward.22} parent=5 // pred_check
      _
    $region30: #{gcniinet_forward.22} parent=5 // pred_check_branch
      %142 = sbr.rel (%p139) target = $region32
    $region31: #{gcniinet_forward.22} parent=5 // pred_region
      %s143 = ssub.s32 %s9, 1
      %s144 = smul.u32 2, %s14
      %p145 = scmp.lt.s32.totalorder %s144, 5
      %s146 = scalar_select %p145, %s144, 5
      %s147 = smul.addr %s146, 8
      %s148 = scalar_lea.vmem %s0, %s147
      %p149 = pneg %p35
      %p150 = pneg %p32
      %p151 = pneg %p56
      %p152 = pneg %p53
      %p153 = pneg %p77
      %p154 = pneg %p74
      %p155 = pneg %p103
      %p156 = pneg %p100
      %s157 = smul.u32 2, %s14
      %p158 = scmp.lt.s32.totalorder %s157, 5
      %s159 = scalar_select %p158, %s157, 5
      %s160 = smul.addr %s159, 8
      %s161 = scalar_lea.vmem %s3, %s160
      %s162 = smul.u32 2, %s14
      %p163 = scmp.lt.s32.totalorder %s162, 5
      %s164 = scalar_select %p163, %s162, 5
      %s165 = smul.addr %s164, 8
      %s166 = scalar_lea.vmem %s0, %s165
      %s167 = smul.u32 2, %s14
      %s168 = smul.u32 2, %s14
      %p169 = scmp.lt.s32.totalorder %s168, 5
      %s170 = scalar_select %p169, %s168, 5
      %s171 = smul.addr %s170, 8
      %s172 = scalar_lea.vmem %s3, %s171
      %s173 = smul.u32 2, %s14
      %v175 = vld [vmem:[%s166] sm:$0xff]
      %v176 = vld [vmem:[%s166 + $0x8] sm:$0xff]
      %v177 = vpack.c.bf16 %v176, %v175
      %v178 = vld [vmem:[%s1] sm:$0xf]
      %v179 = vld [vmem:[%s1 + $0x4] sm:$0xf]
      %v180 = vld [vmem:[%s2] sm:$0x1]
      %v182 = vlaneseq
      %v183 = vshrl.u32 %v182, 7
      %v184 = vsub.s32 0, %v183
      %v185 = vrot.slane %v180, %v184
      %v189 = vunpack.c.l.b16 %v178
      %v190 = vunpack.c.l.b16 %v179
      %v191 = vpack.c.b16 %v190, %v189
      %vm193 = vcmask 130048
      %v195 = vsel %vm193, %v177, 0
      %197 = vmatprep.subr.bf16.mxu0 0
      %198 = vmatpush1.bf16.msra.mxu0 %v191
      %199 = vmatprep.subr.bf16.mxu0 0
      %200 = vmatpush1.bf16.msra.mxu0 0
      %201 = vmatprep.subr.bf16.mxu0 0
      %202 = vmatpush1.bf16.msra.mxu0 0
      %203 = vmatprep.subr.bf16.mxu0 0
      %204 = vmatpush1.bf16.msra.mxu0 0
      %205 = vmatprep.subr.bf16.mxu0 0
      %206 = vmatpush1.bf16.msra.mxu0 0
      %207 = vmatprep.subr.bf16.mxu0 0
      %208 = vmatpush1.bf16.msra.mxu0 0
      %209 = vmatprep.subr.bf16.mxu0 0
      %210 = vmatpush1.bf16.msra.mxu0 0
      %211 = vmatprep.subr.bf16.mxu0 0
      %212 = vmatpush1.bf16.msra.mxu0 0
      %213 = vmatprep.subr.bf16.mxu0 0
      %214 = vmatpush1.bf16.msra.mxu0 0
      %215 = vmatprep.subr.bf16.mxu0 0
      %216 = vmatpush1.bf16.msra.mxu0 0
      %217 = vmatprep.subr.bf16.mxu0 0
      %218 = vmatpush1.bf16.msra.mxu0 0
      %219 = vmatprep.subr.bf16.mxu0 0
      %220 = vmatpush1.bf16.msra.mxu0 0
      %221 = vmatprep.subr.bf16.mxu0 0
      %222 = vmatpush1.bf16.msra.mxu0 0
      %223 = vmatprep.subr.bf16.mxu0 0
      %224 = vmatpush1.bf16.msra.mxu0 0
      %225 = vmatprep.subr.bf16.mxu0 0
      %226 = vmatpush1.bf16.msra.mxu0 0
      %227 = vmatprep.subr.bf16.mxu0 0
      %228 = vmatpush1.bf16.msra.mxu0 0
      %229 = vmatprep.mubr.bf16.mxu0 0
      %230 = vmatmul.mubr.bf16.gmra.mrb[0].mxu0 %v195
      %v231 = vpop.f32.mrb[0].mxu0
      %v232 = vadd.f32 %v185, %v231
      %v233 = vpop.f32.mrb[0].mxu0
      %v234 = vpop.f32.mrb[0].mxu0
      %v235 = vadd.f32 %v185, %v234
      %v236 = vpop.f32.mrb[0].mxu0
      %237 = vdwg.mxu0
      %v238 = vmax.f32 %v232, 0.0
      %v239 = vmax.f32 %v235, 0.0
      %vm240 = vcmask 523264
      %241 = vst.msk [vmem:[%s172] sm:$0xff] %vm240, %v238
      %242 = vst.msk [vmem:[%s172 + $0x8] sm:$0xff] %vm240, %v239
      %s243 = smul.u32 2, %s14
      %p244 = scmp.lt.s32.totalorder %s243, 5
      %s245 = scalar_select %p244, %s243, 5
      %s246 = smul.addr %s245, 8
      %s247 = scalar_lea.vmem %s3, %s246
      // Predicated region
      $region33: #{gcniinet_forward.22} parent=31 // pred_check
        %p248 = pneg %p100
      $region34: #{gcniinet_forward.22} parent=31 // pred_check_branch
        %250 = sbr.rel (%p248) target = $region36
      $region35: #{gcniinet_forward.22} parent=31 // pred_region
        %s251 = smul.u32 2, %s14
      $region36: #{gcniinet_forward.22} parent=31 // pred_fallthru
        _
    $region32: #{gcniinet_forward.22} parent=5 // pred_fallthru
      _
    %p252 = scmp.le.s32.totalorder 2, %s9
    // Predicated region
    $region37: #{gcniinet_forward.22} parent=5 // pred_check
      %p253 = pneg %p252
    $region38: #{gcniinet_forward.22} parent=5 // pred_check_branch
      %255 = sbr.rel (%p253) target = $region40
    $region39: #{gcniinet_forward.22} parent=5 // pred_region
      %s256 = ssub.s32 %s9, 2
      // Predicated region
      $region41: #{gcniinet_forward.22} parent=39 // pred_check
        %p257 = pneg %p106
      $region42: #{gcniinet_forward.22} parent=39 // pred_check_branch
        %259 = sbr.rel (%p257) target = $region44
      $region43: #{gcniinet_forward.22} parent=39 // pred_region
        %s260 = smul.u32 2, %s15
        %p261 = scmp.lt.s32.totalorder %s260, 5
        %s262 = scalar_select %p261, %s260, 5
        %s263 = smul.addr %s262, 8
        %s264 = scalar_lea.vmem %s3, %s263
      $region44: #{gcniinet_forward.22} parent=39 // pred_fallthru
        _
    $region40: #{gcniinet_forward.22} parent=5 // pred_fallthru
      _
  $region6: #{gcniinet_forward.22} parent=0 // loop_footer
    %s13 = sadd.s32 1, %s9
  $region7: #{gcniinet_forward.22} parent=0 // loop_footer_branch
    %8 = sbr.rel target = $region3
  $region8: #{gcniinet_forward.22} parent=0 // loop_exit
    _

// kernel: gcniinet_forward.43
$region0: #{gcniinet_forward.43}
  #allocation0 [shape = 'u32[]', space=smem, size = 0x4, offset = 0x4, fixed_abs, tag = 'smem constant byte address 0x4 - core index']
  #allocation1 [shape = 'u32[144,128]{1,0:T(1,128)}', space=vmem, size = 0x12000, scoped, tag = 'internal scratch']
  %s0 = inlined_call_operand.vmem [shape: f32[48,64], index: 0, kind: input, shape index: {}]
  %s1 = inlined_call_operand.vmem [shape: bf16[64,128], index: 1, kind: input, shape index: {}]
  %s2 = inlined_call_operand.vmem [shape: f32[1,128], index: 2, kind: input, shape index: {}]
  %s3 = inlined_call_operand.vmem [shape: f32[48,128], index: 3, kind: output, shape index: {}]
  %s4 = sld [smem:[#allocation0]]
  $region45: #{gcniinet_forward.43} parent=0
    _
  %s6 = ssub.s32 1, %s4
  %s7 = scalar_select 0, %s6, %s4
  loop: start=0, step=1, limit=5
  $region2: #{gcniinet_forward.43} parent=0 // loop_pre_header
    _
  $region3: #{gcniinet_forward.43} parent=0 // loop_header
    %s9 = sphi 0, %s13
    %p10 = scmp.ge.s32.totalorder %s9, 5
    %s19 = sphi 0, %s21
    %s22 = sphi 0, %s19
    %s23 = sphi 0, %s22
    %s39 = sphi 0, %s23
    %s43 = sphi 0, %s43
    %s45 = sphi 0, %s43
    %s46 = sphi 0, %s45
    %s60 = sphi 0, %s46
    %s64 = sphi 0, %s64
    %s66 = sphi 0, %s64
    %s67 = sphi 0, %s66
    %s81 = sphi 0, %s67
    %s87 = sphi 0, %s89
    %s90 = sphi 0, %s87
    %s91 = sphi 0, %s90
    %s107 = sphi 0, %s91
  $region4: #{gcniinet_forward.43} parent=0 // loop_header_branch
    %12 = sbr.rel (%p10) target = $region8
  $region5: #{gcniinet_forward.43} parent=0 // loop_body
    %s14 = ssub.s32 %s9, 1
    %s15 = ssub.s32 %s9, 2
    %s16 = sadd.s32 %s9, 1
    %s17 = ssub.s32 %s9, %s16
    %p18 = scmp.eq.s32.totalorder %s17, 0
    %s20 = sadd.s32 %s19, 1
    %s21 = scalar_select %p18, %s19, %s20
    %p24 = pneg %p18
    %p25 = scmp.eq.s32.totalorder %s9, 2
    %p26 = por %p24, %p25
    %p27 = scmp.ne.s32.totalorder %s19, %s22
    %p28 = scmp.eq.s32.totalorder %s9, 0
    %p29 = por %p27, %p28
    %p30 = scmp.ne.s32.totalorder %s19, %s22
    %p31 = scmp.eq.s32.totalorder %s14, 2
    %p32 = por %p30, %p31
    %p33 = scmp.ne.s32.totalorder %s22, %s23
    %p34 = scmp.eq.s32.totalorder %s14, 0
    %p35 = por %p33, %p34
    %p36 = scmp.ne.s32.totalorder %s22, %s23
    %p37 = scmp.eq.s32.totalorder %s15, 2
    %p38 = por %p36, %p37
    %p40 = scmp.ne.s32.totalorder %s23, %s39
    %p41 = scmp.eq.s32.totalorder %s15, 0
    %p42 = por %p40, %p41
    %s44 = sadd.s32 %s43, 1
    %p47 = scmp.eq.s32.totalorder %s9, 2
    %p48 = scmp.ne.s32.totalorder %s43, %s45
    %p49 = scmp.eq.s32.totalorder %s9, 0
    %p50 = por %p48, %p49
    %p51 = scmp.ne.s32.totalorder %s43, %s45
    %p52 = scmp.eq.s32.totalorder %s14, 2
    %p53 = por %p51, %p52
    %p54 = scmp.ne.s32.totalorder %s45, %s46
    %p55 = scmp.eq.s32.totalorder %s14, 0
    %p56 = por %p54, %p55
    %p57 = scmp.ne.s32.totalorder %s45, %s46
    %p58 = scmp.eq.s32.totalorder %s15, 2
    %p59 = por %p57, %p58
    %p61 = scmp.ne.s32.totalorder %s46, %s60
    %p62 = scmp.eq.s32.totalorder %s15, 0
    %p63 = por %p61, %p62
    %s65 = sadd.s32 %s64, 1
    %p68 = scmp.eq.s32.totalorder %s9, 2
    %p69 = scmp.ne.s32.totalorder %s64, %s66
    %p70 = scmp.eq.s32.totalorder %s9, 0
    %p71 = por %p69, %p70
    %p72 = scmp.ne.s32.totalorder %s64, %s66
    %p73 = scmp.eq.s32.totalorder %s14, 2
    %p74 = por %p72, %p73
    %p75 = scmp.ne.s32.totalorder %s66, %s67
    %p76 = scmp.eq.s32.totalorder %s14, 0
    %p77 = por %p75, %p76
    %p78 = scmp.ne.s32.totalorder %s66, %s67
    %p79 = scmp.eq.s32.totalorder %s15, 2
    %p80 = por %p78, %p79
    %p82 = scmp.ne.s32.totalorder %s67, %s81
    %p83 = scmp.eq.s32.totalorder %s15, 0
    %p84 = por %p82, %p83
    %s85 = ssub.s32 %s9, %s16
    %p86 = scmp.eq.s32.totalorder %s85, 0
    %s88 = sadd.s32 %s87, 1
    %s89 = scalar_select %p86, %s87, %s88
    %p92 = pneg %p86
    %p93 = scmp.eq.s32.totalorder %s9, 2
    %p94 = por %p92, %p93
    %p95 = scmp.ne.s32.totalorder %s87, %s90
    %p96 = scmp.eq.s32.totalorder %s9, 0
    %p97 = por %p95, %p96
    %p98 = scmp.ne.s32.totalorder %s87, %s90
    %p99 = scmp.eq.s32.totalorder %s14, 2
    %p100 = por %p98, %p99
    %p101 = scmp.ne.s32.totalorder %s90, %s91
    %p102 = scmp.eq.s32.totalorder %s14, 0
    %p103 = por %p101, %p102
    %p104 = scmp.ne.s32.totalorder %s90, %s91
    %p105 = scmp.eq.s32.totalorder %s15, 2
    %p106 = por %p104, %p105
    %p108 = scmp.ne.s32.totalorder %s91, %s107
    %p109 = scmp.eq.s32.totalorder %s15, 0
    %p110 = por %p108, %p109
    %p111 = scmp.le.s32.totalorder 1, %s9
    %p112 = scmp.lt.s32.totalorder %s9, 4
    %p113 = pnand %p111, %p112
    %p114 = pneg %p113
    // Predicated region
    $region9: #{gcniinet_forward.43} parent=5 // pred_check
      _
    $region10: #{gcniinet_forward.43} parent=5 // pred_check_branch
      %116 = sbr.rel (%p113) target = $region12
    $region11: #{gcniinet_forward.43} parent=5 // pred_region
      %s117 = ssub.s32 %s9, 1
      // Predicated region
      $region13: #{gcniinet_forward.43} parent=11 // pred_check
        %p118 = pneg %p56
      $region14: #{gcniinet_forward.43} parent=11 // pred_check_branch
        %120 = sbr.rel (%p118) target = $region16
      $region15: #{gcniinet_forward.43} parent=11 // pred_region
        _
      $region16: #{gcniinet_forward.43} parent=11 // pred_fallthru
        _
      // Predicated region
      $region17: #{gcniinet_forward.43} parent=11 // pred_check
        %p121 = pneg %p77
      $region18: #{gcniinet_forward.43} parent=11 // pred_check_branch
        %123 = sbr.rel (%p121) target = $region20
      $region19: #{gcniinet_forward.43} parent=11 // pred_region
        _
      $region20: #{gcniinet_forward.43} parent=11 // pred_fallthru
        _
    $region12: #{gcniinet_forward.43} parent=5 // pred_fallthru
      _
    %p124 = scmp.lt.s32.totalorder %s9, 3
    // Predicated region
    $region21: #{gcniinet_forward.43} parent=5 // pred_check
      %p125 = pneg %p124
    $region22: #{gcniinet_forward.43} parent=5 // pred_check_branch
      %127 = sbr.rel (%p125) target = $region24
    $region23: #{gcniinet_forward.43} parent=5 // pred_region
      // Predicated region
      $region25: #{gcniinet_forward.43} parent=23 // pred_check
        %p128 = pneg %p29
      $region26: #{gcniinet_forward.43} parent=23 // pred_check_branch
        %130 = sbr.rel (%p128) target = $region28
      $region27: #{gcniinet_forward.43} parent=23 // pred_region
        %s131 = smul.u32 2, %s9
        %p132 = scmp.lt.s32.totalorder %s131, 5
        %s133 = scalar_select %p132, %s131, 5
        %s134 = smul.addr %s133, 8
        %s135 = scalar_lea.vmem %s0, %s134
        %s136 = smul.u32 2, %s9
      $region28: #{gcniinet_forward.43} parent=23 // pred_fallthru
        _
    $region24: #{gcniinet_forward.43} parent=5 // pred_fallthru
      _
    %p137 = scmp.le.s32.totalorder 1, %s9
    %p138 = scmp.lt.s32.totalorder %s9, 4
    %p139 = pnand %p137, %p138
    %p140 = pneg %p139
    // Predicated region
    $region29: #{gcniinet_forward.43} parent=5 // pred_check
      _
    $region30: #{gcniinet_forward.43} parent=5 // pred_check_branch
      %142 = sbr.rel (%p139) target = $region32
    $region31: #{gcniinet_forward.43} parent=5 // pred_region
      %s143 = ssub.s32 %s9, 1
      %s144 = smul.u32 2, %s14
      %p145 = scmp.lt.s32.totalorder %s144, 5
      %s146 = scalar_select %p145, %s144, 5
      %s147 = smul.addr %s146, 8
      %s148 = scalar_lea.vmem %s0, %s147
      %p149 = pneg %p35
      %p150 = pneg %p32
      %p151 = pneg %p56
      %p152 = pneg %p53
      %p153 = pneg %p77
      %p154 = pneg %p74
      %p155 = pneg %p103
      %p156 = pneg %p100
      %s157 = smul.u32 2, %s14
      %p158 = scmp.lt.s32.totalorder %s157, 5
      %s159 = scalar_select %p158, %s157, 5
      %s160 = smul.addr %s159, 8
      %s161 = scalar_lea.vmem %s3, %s160
      %s162 = smul.u32 2, %s14
      %p163 = scmp.lt.s32.totalorder %s162, 5
      %s164 = scalar_select %p163, %s162, 5
      %s165 = smul.addr %s164, 8
      %s166 = scalar_lea.vmem %s0, %s165
      %s167 = smul.u32 2, %s14
      %s168 = smul.u32 2, %s14
      %p169 = scmp.lt.s32.totalorder %s168, 5
      %s170 = scalar_select %p169, %s168, 5
      %s171 = smul.addr %s170, 8
      %s172 = scalar_lea.vmem %s3, %s171
      %s173 = smul.u32 2, %s14
      %v175 = vld [vmem:[%s166] sm:$0xff]
      %v176 = vld [vmem:[%s166 + $0x8] sm:$0xff]
      %v177 = vpack.c.bf16 %v176, %v175
      %v178 = vld [vmem:[%s1] sm:$0xf]
      %v179 = vld [vmem:[%s1 + $0x4] sm:$0xf]
      %v180 = vld [vmem:[%s1 + $0x8] sm:$0xf]
      %v181 = vld [vmem:[%s1 + $0xc] sm:$0xf]
      %v182 = vld [vmem:[%s1 + $0x10] sm:$0xf]
      %v183 = vld [vmem:[%s1 + $0x14] sm:$0xf]
      %v184 = vld [vmem:[%s1 + $0x18] sm:$0xf]
      %v185 = vld [vmem:[%s1 + $0x1c] sm:$0xf]
      %v186 = vld [vmem:[%s2] sm:$0x1]
      %v188 = vlaneseq
      %v189 = vshrl.u32 %v188, 7
      %v190 = vsub.s32 0, %v189
      %v191 = vrot.slane %v186, %v190
      %v201 = vunpack.c.l.b16 %v178
      %v202 = vunpack.c.l.b16 %v179
      %v203 = vunpack.c.l.b16 %v180
      %v204 = vunpack.c.l.b16 %v181
      %v205 = vunpack.c.l.b16 %v182
      %v206 = vunpack.c.l.b16 %v183
      %v207 = vunpack.c.l.b16 %v184
      %v208 = vunpack.c.l.b16 %v185
      %v209 = vpack.c.b16 %v202, %v201
      %v210 = vpack.c.b16 %v204, %v203
      %v211 = vpack.c.b16 %v206, %v205
      %v212 = vpack.c.b16 %v208, %v207
      %vm217 = vcmask 523264
      %v219 = vsel %vm217, %v177, 0
      %221 = vmatprep.subr.bf16.mxu0 0
      %222 = vmatpush1.bf16.msra.mxu0 %v209
      %223 = vmatprep.subr.bf16.mxu0 0
      %224 = vmatpush1.bf16.msra.mxu0 %v210
      %225 = vmatprep.subr.bf16.mxu0 0
      %226 = vmatpush1.bf16.msra.mxu0 %v211
      %227 = vmatprep.subr.bf16.mxu0 0
      %228 = vmatpush1.bf16.msra.mxu0 %v212
      %229 = vmatprep.subr.bf16.mxu0 0
      %230 = vmatpush1.bf16.msra.mxu0 0
      %231 = vmatprep.subr.bf16.mxu0 0
      %232 = vmatpush1.bf16.msra.mxu0 0
      %233 = vmatprep.subr.bf16.mxu0 0
      %234 = vmatpush1.bf16.msra.mxu0 0
      %235 = vmatprep.subr.bf16.mxu0 0
      %236 = vmatpush1.bf16.msra.mxu0 0
      %237 = vmatprep.subr.bf16.mxu0 0
      %238 = vmatpush1.bf16.msra.mxu0 0
      %239 = vmatprep.subr.bf16.mxu0 0
      %240 = vmatpush1.bf16.msra.mxu0 0
      %241 = vmatprep.subr.bf16.mxu0 0
      %242 = vmatpush1.bf16.msra.mxu0 0
      %243 = vmatprep.subr.bf16.mxu0 0
      %244 = vmatpush1.bf16.msra.mxu0 0
      %245 = vmatprep.subr.bf16.mxu0 0
      %246 = vmatpush1.bf16.msra.mxu0 0
      %247 = vmatprep.subr.bf16.mxu0 0
      %248 = vmatpush1.bf16.msra.mxu0 0
      %249 = vmatprep.subr.bf16.mxu0 0
      %250 = vmatpush1.bf16.msra.mxu0 0
      %251 = vmatprep.subr.bf16.mxu0 0
      %252 = vmatpush1.bf16.msra.mxu0 0
      %253 = vmatprep.mubr.bf16.mxu0 0
      %254 = vmatmul.mubr.bf16.gmra.mrb[0].mxu0 %v219
      %v255 = vpop.f32.mrb[0].mxu0
      %v256 = vadd.f32 %v191, %v255
      %v257 = vpop.f32.mrb[0].mxu0
      %v258 = vpop.f32.mrb[0].mxu0
      %v259 = vadd.f32 %v191, %v258
      %v260 = vpop.f32.mrb[0].mxu0
      %261 = vdwg.mxu0
      %262 = vmax.xlane.f32.xlu0 %v256
      %v263 = vpop.xlane.xlu0 %262
      %264 = vmax.xlane.f32.xlu0 %v259
      %v265 = vpop.xlane.xlu0 %264
      %v266 = vsub.f32 %v256, %v263
      %v267 = vsub.f32 %v259, %v265
      %v268 = vmul.f32 %v266, 1.442695
      %v269 = vpow.pop %v268
      %v270 = vmul.f32 %v267, 1.442695
      %v271 = vpow.pop %v270
      %272 = vadd.xlane.f32.xlu0 %v269
      %v273 = vpop.xlane.xlu0 %272
      %274 = vadd.xlane.f32.xlu0 %v271
      %v275 = vpop.xlane.xlu0 %274
      %v276 = vlog2.pop %v273
      %v277 = vmul.f32 %v276, 0.6931472
      %v278 = vlog2.pop %v275
      %v279 = vmul.f32 %v278, 0.6931472
      %v280 = vsub.f32 %v266, %v277
      %v281 = vsub.f32 %v267, %v279
      %282 = vst [vmem:[%s172] sm:$0xff] %v280
      %283 = vst [vmem:[%s172 + $0x8] sm:$0xff] %v281
      %s284 = smul.u32 2, %s14
      %p285 = scmp.lt.s32.totalorder %s284, 5
      %s286 = scalar_select %p285, %s284, 5
      %s287 = smul.addr %s286, 8
      %s288 = scalar_lea.vmem %s3, %s287
      // Predicated region
      $region33: #{gcniinet_forward.43} parent=31 // pred_check
        %p289 = pneg %p100
      $region34: #{gcniinet_forward.43} parent=31 // pred_check_branch
        %291 = sbr.rel (%p289) target = $region36
      $region35: #{gcniinet_forward.43} parent=31 // pred_region
        %s292 = smul.u32 2, %s14
      $region36: #{gcniinet_forward.43} parent=31 // pred_fallthru
        _
    $region32: #{gcniinet_forward.43} parent=5 // pred_fallthru
      _
    %p293 = scmp.le.s32.totalorder 2, %s9
    // Predicated region
    $region37: #{gcniinet_forward.43} parent=5 // pred_check
      %p294 = pneg %p293
    $region38: #{gcniinet_forward.43} parent=5 // pred_check_branch
      %296 = sbr.rel (%p294) target = $region40
    $region39: #{gcniinet_forward.43} parent=5 // pred_region
      %s297 = ssub.s32 %s9, 2
      // Predicated region
      $region41: #{gcniinet_forward.43} parent=39 // pred_check
        %p298 = pneg %p106
      $region42: #{gcniinet_forward.43} parent=39 // pred_check_branch
        %300 = sbr.rel (%p298) target = $region44
      $region43: #{gcniinet_forward.43} parent=39 // pred_region
        %s301 = smul.u32 2, %s15
        %p302 = scmp.lt.s32.totalorder %s301, 5
        %s303 = scalar_select %p302, %s301, 5
        %s304 = smul.addr %s303, 8
        %s305 = scalar_lea.vmem %s3, %s304
      $region44: #{gcniinet_forward.43} parent=39 // pred_fallthru
        _
    $region40: #{gcniinet_forward.43} parent=5 // pred_fallthru
      _
  $region6: #{gcniinet_forward.43} parent=0 // loop_footer
    %s13 = sadd.s32 1, %s9
  $region7: #{gcniinet_forward.43} parent=0 // loop_footer_branch
    %8 = sbr.rel target = $region3
  $region8: #{gcniinet_forward.43} parent=0 // loop_exit
    _

</llo_original>
